<compile_context>
chip_gen: v7x
topology: tpu7x:2x2x1
jax: 0.10.0
libtpu: 0.0.40
codegen_flags: <defaults>
</compile_context>

<pallas_src>
import functools

import jax
import jax.numpy as jnp
from jax.experimental import pallas as pl
from jax.experimental.pallas import tpu as pltpu

_LANE = 128


# ---------------------------------------------------------------------------
# Parameter preparation (call ONCE at init time, not per forward pass).
# ---------------------------------------------------------------------------
def prepare_params(weight, bias):
    """weight: (Cout, Cin, 1, 1); bias: (Cout,).

    Returns (w2d, b2d) with shapes (Cin, Cout_pad) and (1, Cout_pad), f32,
    Cout padded up to a multiple of 128 lanes (zero-padded).
    """
    cout, cin = weight.shape[0], weight.shape[1]
    cout_pad = pl.cdiv(cout, _LANE) * _LANE
    w2d = weight.reshape(cout, cin).T.astype(jnp.float32)          # (Cin, Cout)
    w2d = jnp.pad(w2d, ((0, 0), (0, cout_pad - cout)))              # (Cin, Cout_pad)
    b2d = bias.astype(jnp.float32).reshape(1, cout)
    b2d = jnp.pad(b2d, ((0, 0), (0, cout_pad - cout)))              # (1, Cout_pad)
    return w2d, b2d


# ---------------------------------------------------------------------------
# Kernels
# ---------------------------------------------------------------------------
def _conv1x1_sigmoid_vec_kernel(x_ref, w_ref, b_ref, o_ref):
    # Single-pixel (M == 1) path: VPU broadcast-multiply + sublane reduce,
    # chunked over Cout to keep vreg live range small.
    #   x_ref: (Cin, 1)        f32
    #   w_ref: (Cin, Cout_pad) f32
    #   b_ref: (1, Cout_pad)   f32
    #   o_ref: (1, Cout_pad)   f32
    n_chunks = w_ref.shape[1] // _LANE
    x = x_ref[...]  # hoisted: loaded once, reused by every chunk

    def chunk(c, carry):
        off = pl.multiple_of(c * _LANE, _LANE)
        wc = w_ref[:, pl.ds(off, _LANE)]
        bc = b_ref[:, pl.ds(off, _LANE)]
        z = jnp.sum(x * wc, axis=0, keepdims=True) + bc
        o_ref[:, pl.ds(off, _LANE)] = 1.0 / (1.0 + jnp.exp(-z))
        return carry

    jax.lax.fori_loop(0, n_chunks, chunk, 0, unroll=True)


def _conv1x1_sigmoid_mxu_kernel(x_ref, w_ref, b_ref, o_ref):
    # General (M > 1) fallback: f32 MXU matmul per M-tile.
    #   x_ref: (TM, Cin) f32, w_ref: (Cin, Cout_pad) f32, b_ref: (1, Cout_pad)
    z = jnp.dot(x_ref[...], w_ref[...],
                preferred_element_type=jnp.float32) + b_ref[...]
    o_ref[...] = (1.0 / (1.0 + jnp.exp(-z))).astype(o_ref.dtype)


# ---------------------------------------------------------------------------
# Forward wrapper
# ---------------------------------------------------------------------------
def conv1x1_sigmoid(x_nchw, w2d, b2d, cout):
    """x_nchw: (N, Cin, H, W); w2d: (Cin, Cout_pad); b2d: (1, Cout_pad)."""
    n, cin, h, w = x_nchw.shape
    cout_pad = w2d.shape[1]
    m = n * h * w

    vmem = pl.BlockSpec(memory_space=pltpu.MemorySpace.VMEM)

    if m == 1:
        # N == H == W == 1: pure reshape in the wrapper, no transposes.
        x_col = x_nchw.reshape(cin, 1).astype(jnp.float32)
        cost = pl.CostEstimate(
            flops=2 * cin * cout,
            transcendentals=cout,
            bytes_accessed=4 * (cin + cin * cout_pad + 2 * cout_pad),
        )
        out_pad = pl.pallas_call(
            _conv1x1_sigmoid_vec_kernel,
            out_shape=jax.ShapeDtypeStruct((1, cout_pad), jnp.float32),
            in_specs=[vmem, vmem, vmem],
            out_specs=vmem,
            cost_estimate=cost,
        )(x_col, w2d, b2d)
        return out_pad[:, :cout].reshape(n, cout, h, w).astype(x_nchw.dtype)

    # ----- M > 1 fallback (not exercised by this module's [1,44,1,1] input) --
    tm = 256
    m_pad = pl.cdiv(m, tm) * tm
    x2d = jnp.transpose(x_nchw, (0, 2, 3, 1)).reshape(m, cin).astype(jnp.float32)
    x2d = jnp.pad(x2d, ((0, m_pad - m), (0, 0)))

    cost = pl.CostEstimate(
        flops=2 * m * cin * cout,
        transcendentals=m * cout,
        bytes_accessed=4 * (m_pad * cin + cin * cout_pad + cout_pad
                            + m_pad * cout_pad),
    )
    out_pad = pl.pallas_call(
        _conv1x1_sigmoid_mxu_kernel,
        out_shape=jax.ShapeDtypeStruct((m_pad, cout_pad), jnp.float32),
        grid=(m_pad // tm,),
        in_specs=[
            pl.BlockSpec((tm, cin), lambda i: (i, 0)),
            pl.BlockSpec((cin, cout_pad), lambda i: (0, 0)),
            pl.BlockSpec((1, cout_pad), lambda i: (0, 0)),
        ],
        out_specs=pl.BlockSpec((tm, cout_pad), lambda i: (i, 0)),
        compiler_params=pltpu.CompilerParams(
            dimension_semantics=("parallel",)),
        cost_estimate=cost,
    )(x2d, w2d, b2d)
    out2d = out_pad[:m, :cout]
    return jnp.transpose(out2d.reshape(n, h, w, cout),
                         (0, 3, 1, 2)).astype(x_nchw.dtype)


# ---------------------------------------------------------------------------
# Self-test
# ---------------------------------------------------------------------------
if __name__ == "__main__":
    key = jax.random.PRNGKey(0)
    k_x, k_w, k_b, k_x2 = jax.random.split(key, 4)

    N, Cin, H, W = 1, 44, 1, 1
    Cout = 1056

    # Deterministic synthetic parameters matching Conv2d(44, 1056, 1) shapes.
    x = jax.random.normal(k_x, (N, Cin, H, W), dtype=jnp.float32)
    weight = jax.random.normal(k_w, (Cout, Cin, 1, 1), dtype=jnp.float32) * 0.05
    bias = jax.random.normal(k_b, (Cout,), dtype=jnp.float32) * 0.05

    # Layout work done once, off the hot path.
    w2d, b2d = prepare_params(weight, bias)

    fwd = jax.jit(conv1x1_sigmoid, static_argnums=3)

    # --- Main path: the module's actual [1,44,1,1] input ---------------------
    out = jax.block_until_ready(fwd(x, w2d, b2d, Cout))
    ref = jax.nn.sigmoid(
        jnp.einsum("nchw,oc->nohw", x, weight.reshape(Cout, Cin))
        + bias.reshape(1, Cout, 1, 1))
    assert out.shape == (N, Cout, H, W)
    assert jnp.allclose(out, ref, atol=1e-5, rtol=1e-5)

    # --- Secondary check of the tiled M>1 fallback (tiny shape) --------------
    x2 = jax.random.normal(k_x2, (2, Cin, 3, 5), dtype=jnp.float32)
    out2 = jax.block_until_ready(fwd(x2, w2d, b2d, Cout))
    ref2 = jax.nn.sigmoid(
        jnp.einsum("nchw,oc->nohw", x2, weight.reshape(Cout, Cin))
        + bias.reshape(1, Cout, 1, 1))
    assert out2.shape == (2, Cout, 3, 5)
    assert jnp.allclose(out2, ref2, atol=2e-3, rtol=2e-3)

    print("KERNEL_OK")
</pallas_src>

<mosaic_0001>
module attributes {stable_mosaic.version = 11 : i64} {
  func.func @_conv1x1_sigmoid_vec_kernel(%arg0: memref<44x1xf32, #tpu.memory_space<vmem>>, %arg1: memref<44x1152xf32, #tpu.memory_space<vmem>>, %arg2: memref<1x1152xf32, #tpu.memory_space<vmem>>, %arg3: memref<1x1152xf32, #tpu.memory_space<vmem>>) attributes {dimension_semantics = [], scalar_prefetch = 0 : i64, scratch_operands = 0 : i64, tpu.core_type = #tpu.core_type<tc>} {
    %c0 = arith.constant 0 : index
    %c0_0 = arith.constant 0 : index
    %0 = vector.load %arg0[%c0, %c0_0] : memref<44x1xf32, #tpu.memory_space<vmem>>, vector<44x1xf32>
    %c0_i32 = arith.constant 0 : i32
    %c128_i32 = arith.constant 128 : i32
    %1 = arith.muli %c0_i32, %c128_i32 : i32
    %2 = tpu.assume_multiple %1, 128 : i32
    %c0_1 = arith.constant 0 : index
    %3 = arith.index_cast %2 : i32 to index
    %4 = vector.load %arg1[%c0_1, %3] : memref<44x1152xf32, #tpu.memory_space<vmem>>, vector<44x128xf32>
    %c0_2 = arith.constant 0 : index
    %5 = arith.index_cast %2 : i32 to index
    %6 = vector.load %arg2[%c0_2, %5] : memref<1x1152xf32, #tpu.memory_space<vmem>>, vector<1x128xf32>
    %7 = vector.broadcast %0 : vector<44x1xf32> to vector<44x128xf32>
    %8 = arith.mulf %7, %4 : vector<44x128xf32>
    %cst = arith.constant dense<0.000000e+00> : vector<128xf32>
    %9 = vector.multi_reduction <add>, %8, %cst [0] : vector<44x128xf32> to vector<128xf32>
    %10 = vector.shape_cast %9 : vector<128xf32> to vector<1x128xf32>
    %11 = arith.addf %10, %6 : vector<1x128xf32>
    %cst_3 = arith.constant 0.000000e+00 : f32
    %12 = vector.broadcast %cst_3 : f32 to vector<1x128xf32>
    %13 = arith.subf %12, %11 : vector<1x128xf32>
    %14 = math.exp %13 : vector<1x128xf32>
    %cst_4 = arith.constant 1.000000e+00 : f32
    %15 = vector.broadcast %cst_4 : f32 to vector<1x128xf32>
    %16 = arith.addf %15, %14 : vector<1x128xf32>
    %cst_5 = arith.constant 1.000000e+00 : f32
    %17 = vector.broadcast %cst_5 : f32 to vector<1x128xf32>
    %18 = arith.divf %17, %16 : vector<1x128xf32>
    %c0_6 = arith.constant 0 : index
    %19 = arith.index_cast %2 : i32 to index
    %20 = vector.load %arg3[%c0_6, %19] : memref<1x1152xf32, #tpu.memory_space<vmem>>, vector<1x128xf32>
    tpu.vector_store %arg3[%c0_6, %19], %18 {strides = array<i32>} : memref<1x1152xf32, #tpu.memory_space<vmem>>, vector<1x128xf32>,
    %c1_i32 = arith.constant 1 : i32
    %c128_i32_7 = arith.constant 128 : i32
    %21 = arith.muli %c1_i32, %c128_i32_7 : i32
    %22 = tpu.assume_multiple %21, 128 : i32
    %c0_8 = arith.constant 0 : index
    %23 = arith.index_cast %22 : i32 to index
    %24 = vector.load %arg1[%c0_8, %23] : memref<44x1152xf32, #tpu.memory_space<vmem>>, vector<44x128xf32>
    %c0_9 = arith.constant 0 : index
    %25 = arith.index_cast %22 : i32 to index
    %26 = vector.load %arg2[%c0_9, %25] : memref<1x1152xf32, #tpu.memory_space<vmem>>, vector<1x128xf32>
    %27 = vector.broadcast %0 : vector<44x1xf32> to vector<44x128xf32>
    %28 = arith.mulf %27, %24 : vector<44x128xf32>
    %cst_10 = arith.constant dense<0.000000e+00> : vector<128xf32>
    %29 = vector.multi_reduction <add>, %28, %cst_10 [0] : vector<44x128xf32> to vector<128xf32>
    %30 = vector.shape_cast %29 : vector<128xf32> to vector<1x128xf32>
    %31 = arith.addf %30, %26 : vector<1x128xf32>
    %cst_11 = arith.constant 0.000000e+00 : f32
    %32 = vector.broadcast %cst_11 : f32 to vector<1x128xf32>
    %33 = arith.subf %32, %31 : vector<1x128xf32>
    %34 = math.exp %33 : vector<1x128xf32>
    %cst_12 = arith.constant 1.000000e+00 : f32
    %35 = vector.broadcast %cst_12 : f32 to vector<1x128xf32>
    %36 = arith.addf %35, %34 : vector<1x128xf32>
    %cst_13 = arith.constant 1.000000e+00 : f32
    %37 = vector.broadcast %cst_13 : f32 to vector<1x128xf32>
    %38 = arith.divf %37, %36 : vector<1x128xf32>
    %c0_14 = arith.constant 0 : index
    %39 = arith.index_cast %22 : i32 to index
    %40 = vector.load %arg3[%c0_14, %39] : memref<1x1152xf32, #tpu.memory_space<vmem>>, vector<1x128xf32>
    tpu.vector_store %arg3[%c0_14, %39], %38 {strides = array<i32>} : memref<1x1152xf32, #tpu.memory_space<vmem>>, vector<1x128xf32>,
    %c2_i32 = arith.constant 2 : i32
    %c128_i32_15 = arith.constant 128 : i32
    %41 = arith.muli %c2_i32, %c128_i32_15 : i32
    %42 = tpu.assume_multiple %41, 128 : i32
    %c0_16 = arith.constant 0 : index
    %43 = arith.index_cast %42 : i32 to index
    %44 = vector.load %arg1[%c0_16, %43] : memref<44x1152xf32, #tpu.memory_space<vmem>>, vector<44x128xf32>
    %c0_17 = arith.constant 0 : index
    %45 = arith.index_cast %42 : i32 to index
    %46 = vector.load %arg2[%c0_17, %45] : memref<1x1152xf32, #tpu.memory_space<vmem>>, vector<1x128xf32>
    %47 = vector.broadcast %0 : vector<44x1xf32> to vector<44x128xf32>
    %48 = arith.mulf %47, %44 : vector<44x128xf32>
    %cst_18 = arith.constant dense<0.000000e+00> : vector<128xf32>
    %49 = vector.multi_reduction <add>, %48, %cst_18 [0] : vector<44x128xf32> to vector<128xf32>
    %50 = vector.shape_cast %49 : vector<128xf32> to vector<1x128xf32>
    %51 = arith.addf %50, %46 : vector<1x128xf32>
    %cst_19 = arith.constant 0.000000e+00 : f32
    %52 = vector.broadcast %cst_19 : f32 to vector<1x128xf32>
    %53 = arith.subf %52, %51 : vector<1x128xf32>
    %54 = math.exp %53 : vector<1x128xf32>
    %cst_20 = arith.constant 1.000000e+00 : f32
    %55 = vector.broadcast %cst_20 : f32 to vector<1x128xf32>
    %56 = arith.addf %55, %54 : vector<1x128xf32>
    %cst_21 = arith.constant 1.000000e+00 : f32
    %57 = vector.broadcast %cst_21 : f32 to vector<1x128xf32>
    %58 = arith.divf %57, %56 : vector<1x128xf32>
    %c0_22 = arith.constant 0 : index
    %59 = arith.index_cast %42 : i32 to index
    %60 = vector.load %arg3[%c0_22, %59] : memref<1x1152xf32, #tpu.memory_space<vmem>>, vector<1x128xf32>
    tpu.vector_store %arg3[%c0_22, %59], %58 {strides = array<i32>} : memref<1x1152xf32, #tpu.memory_space<vmem>>, vector<1x128xf32>,
    %c3_i32 = arith.constant 3 : i32
    %c128_i32_23 = arith.constant 128 : i32
    %61 = arith.muli %c3_i32, %c128_i32_23 : i32
    %62 = tpu.assume_multiple %61, 128 : i32
    %c0_24 = arith.constant 0 : index
    %63 = arith.index_cast %62 : i32 to index
    %64 = vector.load %arg1[%c0_24, %63] : memref<44x1152xf32, #tpu.memory_space<vmem>>, vector<44x128xf32>
    %c0_25 = arith.constant 0 : index
    %65 = arith.index_cast %62 : i32 to index
    %66 = vector.load %arg2[%c0_25, %65] : memref<1x1152xf32, #tpu.memory_space<vmem>>, vector<1x128xf32>
    %67 = vector.broadcast %0 : vector<44x1xf32> to vector<44x128xf32>
    %68 = arith.mulf %67, %64 : vector<44x128xf32>
    %cst_26 = arith.constant dense<0.000000e+00> : vector<128xf32>
    %69 = vector.multi_reduction <add>, %68, %cst_26 [0] : vector<44x128xf32> to vector<128xf32>
    %70 = vector.shape_cast %69 : vector<128xf32> to vector<1x128xf32>
    %71 = arith.addf %70, %66 : vector<1x128xf32>
    %cst_27 = arith.constant 0.000000e+00 : f32
    %72 = vector.broadcast %cst_27 : f32 to vector<1x128xf32>
    %73 = arith.subf %72, %71 : vector<1x128xf32>
    %74 = math.exp %73 : vector<1x128xf32>
    %cst_28 = arith.constant 1.000000e+00 : f32
    %75 = vector.broadcast %cst_28 : f32 to vector<1x128xf32>
    %76 = arith.addf %75, %74 : vector<1x128xf32>
    %cst_29 = arith.constant 1.000000e+00 : f32
    %77 = vector.broadcast %cst_29 : f32 to vector<1x128xf32>
    %78 = arith.divf %77, %76 : vector<1x128xf32>
    %c0_30 = arith.constant 0 : index
    %79 = arith.index_cast %62 : i32 to index
    %80 = vector.load %arg3[%c0_30, %79] : memref<1x1152xf32, #tpu.memory_space<vmem>>, vector<1x128xf32>
    tpu.vector_store %arg3[%c0_30, %79], %78 {strides = array<i32>} : memref<1x1152xf32, #tpu.memory_space<vmem>>, vector<1x128xf32>,
    %c4_i32 = arith.constant 4 : i32
    %c128_i32_31 = arith.constant 128 : i32
    %81 = arith.muli %c4_i32, %c128_i32_31 : i32
    %82 = tpu.assume_multiple %81, 128 : i32
    %c0_32 = arith.constant 0 : index
    %83 = arith.index_cast %82 : i32 to index
    %84 = vector.load %arg1[%c0_32, %83] : memref<44x1152xf32, #tpu.memory_space<vmem>>, vector<44x128xf32>
    %c0_33 = arith.constant 0 : index
    %85 = arith.index_cast %82 : i32 to index
    %86 = vector.load %arg2[%c0_33, %85] : memref<1x1152xf32, #tpu.memory_space<vmem>>, vector<1x128xf32>
    %87 = vector.broadcast %0 : vector<44x1xf32> to vector<44x128xf32>
    %88 = arith.mulf %87, %84 : vector<44x128xf32>
    %cst_34 = arith.constant dense<0.000000e+00> : vector<128xf32>
    %89 = vector.multi_reduction <add>, %88, %cst_34 [0] : vector<44x128xf32> to vector<128xf32>
    %90 = vector.shape_cast %89 : vector<128xf32> to vector<1x128xf32>
    %91 = arith.addf %90, %86 : vector<1x128xf32>
    %cst_35 = arith.constant 0.000000e+00 : f32
    %92 = vector.broadcast %cst_35 : f32 to vector<1x128xf32>
    %93 = arith.subf %92, %91 : vector<1x128xf32>
    %94 = math.exp %93 : vector<1x128xf32>
    %cst_36 = arith.constant 1.000000e+00 : f32
    %95 = vector.broadcast %cst_36 : f32 to vector<1x128xf32>
    %96 = arith.addf %95, %94 : vector<1x128xf32>
    %cst_37 = arith.constant 1.000000e+00 : f32
    %97 = vector.broadcast %cst_37 : f32 to vector<1x128xf32>
    %98 = arith.divf %97, %96 : vector<1x128xf32>
    %c0_38 = arith.constant 0 : index
    %99 = arith.index_cast %82 : i32 to index
    %100 = vector.load %arg3[%c0_38, %99] : memref<1x1152xf32, #tpu.memory_space<vmem>>, vector<1x128xf32>
    tpu.vector_store %arg3[%c0_38, %99], %98 {strides = array<i32>} : memref<1x1152xf32, #tpu.memory_space<vmem>>, vector<1x128xf32>,
    %c5_i32 = arith.constant 5 : i32
    %c128_i32_39 = arith.constant 128 : i32
    %101 = arith.muli %c5_i32, %c128_i32_39 : i32
    %102 = tpu.assume_multiple %101, 128 : i32
    %c0_40 = arith.constant 0 : index
    %103 = arith.index_cast %102 : i32 to index
    %104 = vector.load %arg1[%c0_40, %103] : memref<44x1152xf32, #tpu.memory_space<vmem>>, vector<44x128xf32>
    %c0_41 = arith.constant 0 : index
    %105 = arith.index_cast %102 : i32 to index
    %106 = vector.load %arg2[%c0_41, %105] : memref<1x1152xf32, #tpu.memory_space<vmem>>, vector<1x128xf32>
    %107 = vector.broadcast %0 : vector<44x1xf32> to vector<44x128xf32>
    %108 = arith.mulf %107, %104 : vector<44x128xf32>
    %cst_42 = arith.constant dense<0.000000e+00> : vector<128xf32>
    %109 = vector.multi_reduction <add>, %108, %cst_42 [0] : vector<44x128xf32> to vector<128xf32>
    %110 = vector.shape_cast %109 : vector<128xf32> to vector<1x128xf32>
    %111 = arith.addf %110, %106 : vector<1x128xf32>
    %cst_43 = arith.constant 0.000000e+00 : f32
    %112 = vector.broadcast %cst_43 : f32 to vector<1x128xf32>
    %113 = arith.subf %112, %111 : vector<1x128xf32>
    %114 = math.exp %113 : vector<1x128xf32>
    %cst_44 = arith.constant 1.000000e+00 : f32
    %115 = vector.broadcast %cst_44 : f32 to vector<1x128xf32>
    %116 = arith.addf %115, %114 : vector<1x128xf32>
    %cst_45 = arith.constant 1.000000e+00 : f32
    %117 = vector.broadcast %cst_45 : f32 to vector<1x128xf32>
    %118 = arith.divf %117, %116 : vector<1x128xf32>
    %c0_46 = arith.constant 0 : index
    %119 = arith.index_cast %102 : i32 to index
    %120 = vector.load %arg3[%c0_46, %119] : memref<1x1152xf32, #tpu.memory_space<vmem>>, vector<1x128xf32>
    tpu.vector_store %arg3[%c0_46, %119], %118 {strides = array<i32>} : memref<1x1152xf32, #tpu.memory_space<vmem>>, vector<1x128xf32>,
    %c6_i32 = arith.constant 6 : i32
    %c128_i32_47 = arith.constant 128 : i32
    %121 = arith.muli %c6_i32, %c128_i32_47 : i32
    %122 = tpu.assume_multiple %121, 128 : i32
    %c0_48 = arith.constant 0 : index
    %123 = arith.index_cast %122 : i32 to index
    %124 = vector.load %arg1[%c0_48, %123] : memref<44x1152xf32, #tpu.memory_space<vmem>>, vector<44x128xf32>
    %c0_49 = arith.constant 0 : index
    %125 = arith.index_cast %122 : i32 to index
    %126 = vector.load %arg2[%c0_49, %125] : memref<1x1152xf32, #tpu.memory_space<vmem>>, vector<1x128xf32>
    %127 = vector.broadcast %0 : vector<44x1xf32> to vector<44x128xf32>
    %128 = arith.mulf %127, %124 : vector<44x128xf32>
    %cst_50 = arith.constant dense<0.000000e+00> : vector<128xf32>
    %129 = vector.multi_reduction <add>, %128, %cst_50 [0] : vector<44x128xf32> to vector<128xf32>
    %130 = vector.shape_cast %129 : vector<128xf32> to vector<1x128xf32>
    %131 = arith.addf %130, %126 : vector<1x128xf32>
    %cst_51 = arith.constant 0.000000e+00 : f32
    %132 = vector.broadcast %cst_51 : f32 to vector<1x128xf32>
    %133 = arith.subf %132, %131 : vector<1x128xf32>
    %134 = math.exp %133 : vector<1x128xf32>
    %cst_52 = arith.constant 1.000000e+00 : f32
    %135 = vector.broadcast %cst_52 : f32 to vector<1x128xf32>
    %136 = arith.addf %135, %134 : vector<1x128xf32>
    %cst_53 = arith.constant 1.000000e+00 : f32
    %137 = vector.broadcast %cst_53 : f32 to vector<1x128xf32>
    %138 = arith.divf %137, %136 : vector<1x128xf32>
    %c0_54 = arith.constant 0 : index
    %139 = arith.index_cast %122 : i32 to index
    %140 = vector.load %arg3[%c0_54, %139] : memref<1x1152xf32, #tpu.memory_space<vmem>>, vector<1x128xf32>
    tpu.vector_store %arg3[%c0_54, %139], %138 {strides = array<i32>} : memref<1x1152xf32, #tpu.memory_space<vmem>>, vector<1x128xf32>,
    %c7_i32 = arith.constant 7 : i32
    %c128_i32_55 = arith.constant 128 : i32
    %141 = arith.muli %c7_i32, %c128_i32_55 : i32
    %142 = tpu.assume_multiple %141, 128 : i32
    %c0_56 = arith.constant 0 : index
    %143 = arith.index_cast %142 : i32 to index
    %144 = vector.load %arg1[%c0_56, %143] : memref<44x1152xf32, #tpu.memory_space<vmem>>, vector<44x128xf32>
    %c0_57 = arith.constant 0 : index
    %145 = arith.index_cast %142 : i32 to index
    %146 = vector.load %arg2[%c0_57, %145] : memref<1x1152xf32, #tpu.memory_space<vmem>>, vector<1x128xf32>
    %147 = vector.broadcast %0 : vector<44x1xf32> to vector<44x128xf32>
    %148 = arith.mulf %147, %144 : vector<44x128xf32>
    %cst_58 = arith.constant dense<0.000000e+00> : vector<128xf32>
    %149 = vector.multi_reduction <add>, %148, %cst_58 [0] : vector<44x128xf32> to vector<128xf32>
    %150 = vector.shape_cast %149 : vector<128xf32> to vector<1x128xf32>
    %151 = arith.addf %150, %146 : vector<1x128xf32>
    %cst_59 = arith.constant 0.000000e+00 : f32
    %152 = vector.broadcast %cst_59 : f32 to vector<1x128xf32>
    %153 = arith.subf %152, %151 : vector<1x128xf32>
    %154 = math.exp %153 : vector<1x128xf32>
    %cst_60 = arith.constant 1.000000e+00 : f32
    %155 = vector.broadcast %cst_60 : f32 to vector<1x128xf32>
    %156 = arith.addf %155, %154 : vector<1x128xf32>
    %cst_61 = arith.constant 1.000000e+00 : f32
    %157 = vector.broadcast %cst_61 : f32 to vector<1x128xf32>
    %158 = arith.divf %157, %156 : vector<1x128xf32>
    %c0_62 = arith.constant 0 : index
    %159 = arith.index_cast %142 : i32 to index
    %160 = vector.load %arg3[%c0_62, %159] : memref<1x1152xf32, #tpu.memory_space<vmem>>, vector<1x128xf32>
    tpu.vector_store %arg3[%c0_62, %159], %158 {strides = array<i32>} : memref<1x1152xf32, #tpu.memory_space<vmem>>, vector<1x128xf32>,
    %c8_i32 = arith.constant 8 : i32
    %c128_i32_63 = arith.constant 128 : i32
    %161 = arith.muli %c8_i32, %c128_i32_63 : i32
    %162 = tpu.assume_multiple %161, 128 : i32
    %c0_64 = arith.constant 0 : index
    %163 = arith.index_cast %162 : i32 to index
    %164 = vector.load %arg1[%c0_64, %163] : memref<44x1152xf32, #tpu.memory_space<vmem>>, vector<44x128xf32>
    %c0_65 = arith.constant 0 : index
    %165 = arith.index_cast %162 : i32 to index
    %166 = vector.load %arg2[%c0_65, %165] : memref<1x1152xf32, #tpu.memory_space<vmem>>, vector<1x128xf32>
    %167 = vector.broadcast %0 : vector<44x1xf32> to vector<44x128xf32>
    %168 = arith.mulf %167, %164 : vector<44x128xf32>
    %cst_66 = arith.constant dense<0.000000e+00> : vector<128xf32>
    %169 = vector.multi_reduction <add>, %168, %cst_66 [0] : vector<44x128xf32> to vector<128xf32>
    %170 = vector.shape_cast %169 : vector<128xf32> to vector<1x128xf32>
    %171 = arith.addf %170, %166 : vector<1x128xf32>
    %cst_67 = arith.constant 0.000000e+00 : f32
    %172 = vector.broadcast %cst_67 : f32 to vector<1x128xf32>
    %173 = arith.subf %172, %171 : vector<1x128xf32>
    %174 = math.exp %173 : vector<1x128xf32>
    %cst_68 = arith.constant 1.000000e+00 : f32
    %175 = vector.broadcast %cst_68 : f32 to vector<1x128xf32>
    %176 = arith.addf %175, %174 : vector<1x128xf32>
    %cst_69 = arith.constant 1.000000e+00 : f32
    %177 = vector.broadcast %cst_69 : f32 to vector<1x128xf32>
    %178 = arith.divf %177, %176 : vector<1x128xf32>
    %c0_70 = arith.constant 0 : index
    %179 = arith.index_cast %162 : i32 to index
    %180 = vector.load %arg3[%c0_70, %179] : memref<1x1152xf32, #tpu.memory_space<vmem>>, vector<1x128xf32>
    tpu.vector_store %arg3[%c0_70, %179], %178 {strides = array<i32>} : memref<1x1152xf32, #tpu.memory_space<vmem>>, vector<1x128xf32>,
    %c9_i32 = arith.constant 9 : i32
    return
  }
}

</mosaic_0001>

<llo_original>
// kernel: conv1x1_sigmoid.1
$region0: #{conv1x1_sigmoid.1}
  #allocation0 [shape = 'u32[]', space=smem, size = 0x4, offset = 0x4, fixed_abs, tag = 'smem constant byte address 0x4 - core index']
  #allocation1 [shape = 'u32[144,128]{1,0:T(1,128)}', space=vmem, size = 0x12000, scoped, tag = 'internal scratch']
  %s0 = inlined_call_operand.vmem [shape: f32[44,1], index: 0, kind: input, shape index: {}]
  %s1 = inlined_call_operand.hbm [shape: f32[44,1152], index: 1, kind: input, shape index: {}]
  %s2 = inlined_call_operand.vmem [shape: f32[1,1152], index: 2, kind: input, shape index: {}]
  %s3 = inlined_call_operand.vmem [shape: f32[1,1152], index: 3, kind: output, shape index: {}]
  %s4 = sld [smem:[#allocation0]]
  $region26: #{conv1x1_sigmoid.1} parent=0
    _
  %s6 = ssub.s32 1, %s4
  %s7 = scalar_select 0, %s6, %s4
  $region1: #{conv1x1_sigmoid.1} parent=0
    #allocation2 [shape = 'u8[221184]{0}', space=vmem, size = 0x36000, scoped, tag = 'input window, operand 1, single buffered']
    #allocation3 [shape = 's32[1]{0}', space=sflag, size = 0x4, scoped, tag = 'scoped memory for conv1x1_sigmoid.1']
    %8 = vsyncpa [#allocation3], 0
    // Predicated region
    $region2: #{conv1x1_sigmoid.1} parent=1 // pred_check
      _
    $region3: #{conv1x1_sigmoid.1} parent=1 // pred_check_branch
      %10 = sbr.rel (0) target = $region5
    $region4: #{conv1x1_sigmoid.1} parent=1 // pred_region
      _
    $region5: #{conv1x1_sigmoid.1} parent=1 // pred_fallthru
      _
    // Predicated region
    $region6: #{conv1x1_sigmoid.1} parent=1 // pred_check
      _
    $region7: #{conv1x1_sigmoid.1} parent=1 // pred_check_branch
      %12 = sbr.rel (0) target = $region9
    $region8: #{conv1x1_sigmoid.1} parent=1 // pred_region
      %s14 = ssub.s32 6912, 6912
      %15 = vsyncadd [#allocation3], %s14
      %s16 = sshll.u32 [#allocation2], 4
      %s17 = int_to_ptr.vmem [resolvable:$true] %s16
      %22 = dma.hbm_to_vmem [thread:$0]  %s1, 6912, %s17, [#allocation3], 1152, 1152, 72
    $region9: #{conv1x1_sigmoid.1} parent=1 // pred_fallthru
      _
    // Predicated region
    $region10: #{conv1x1_sigmoid.1} parent=1 // pred_check
      _
    $region11: #{conv1x1_sigmoid.1} parent=1 // pred_check_branch
      %24 = sbr.rel (0) target = $region13
    $region12: #{conv1x1_sigmoid.1} parent=1 // pred_region
      _
    $region13: #{conv1x1_sigmoid.1} parent=1 // pred_fallthru
      _
    // Predicated region
    $region14: #{conv1x1_sigmoid.1} parent=1 // pred_check
      _
    $region15: #{conv1x1_sigmoid.1} parent=1 // pred_check_branch
      %26 = sbr.rel (0) target = $region17
    $region16: #{conv1x1_sigmoid.1} parent=1 // pred_region
      %27 = dma.done [#allocation3], 6912
    $region17: #{conv1x1_sigmoid.1} parent=1 // pred_fallthru
      _
    %v28 = vld [vmem:[%s0] sm:$0xff]
    %v29 = vld [vmem:[%s0 + $0x8] sm:$0xff]
    %v30 = vld [vmem:[%s0 + $0x10] sm:$0xff]
    %v31 = vld [vmem:[%s0 + $0x18] sm:$0xff]
    %v32 = vld [vmem:[%s0 + $0x20] sm:$0xff]
    %v33 = vld [vmem:[%s0 + $0x28] sm:$0xf]
    %v34 = vld [vmem:[#allocation2] sm:$0xff]
    %v35 = vld [vmem:[#allocation2 + $0x48] sm:$0xff]
    %v36 = vld [vmem:[#allocation2 + $0x90] sm:$0xff]
    %v37 = vld [vmem:[#allocation2 + $0xd8] sm:$0xff]
    %v38 = vld [vmem:[#allocation2 + $0x120] sm:$0xff]
    %v39 = vld [vmem:[#allocation2 + $0x168] sm:$0xf]
    %v40 = vld [vmem:[%s2] sm:$0x1]
    %42 = vset.pattern.permute.xlu0 0
    %43 = vperm.xlu0 %42, %v28
    %v44 = vpop.permute.xlu0 %43
    %47 = vset.pattern.permute.xlu0 0
    %48 = vperm.xlu0 %47, %v29
    %v49 = vpop.permute.xlu0 %48
    %52 = vset.pattern.permute.xlu0 0
    %53 = vperm.xlu0 %52, %v30
    %v54 = vpop.permute.xlu0 %53
    %57 = vset.pattern.permute.xlu0 0
    %58 = vperm.xlu0 %57, %v31
    %v59 = vpop.permute.xlu0 %58
    %62 = vset.pattern.permute.xlu0 0
    %63 = vperm.xlu0 %62, %v32
    %v64 = vpop.permute.xlu0 %63
    %67 = vset.pattern.permute.xlu0 0
    %68 = vperm.xlu0 %67, %v33
    %v69 = vpop.permute.xlu0 %68
    %v71 = vmul.f32 %v44, %v34
    %v72 = vmul.f32 %v49, %v35
    %v73 = vmul.f32 %v54, %v36
    %v74 = vmul.f32 %v59, %v37
    %v75 = vmul.f32 %v64, %v38
    %v76 = vmul.f32 %v69, %v39
    %v77 = vadd.f32 %v71, %v72
    %v78 = vadd.f32 %v77, %v73
    %v79 = vadd.f32 %v78, %v74
    %v80 = vadd.f32 %v79, %v75
    %vm81 = vcmask 1043456
    %v82 = vsel %vm81, %v76, 0.0
    %v83 = vadd.f32 %v80, %v82
    %v84 = vrot.slane %v83, 4
    %v85 = vadd.f32 %v83, %v84
    %v86 = vrot.slane %v85, 2
    %v87 = vadd.f32 %v85, %v86
    %v88 = vrot.slane %v87, 1
    %v89 = vadd.f32 %v87, %v88
    %v90 = vadd.f32 %v89, %v40
    %v91 = vsub.f32 0.0, %v90
    %v92 = vmul.f32 %v91, 1.442695
    %v93 = vpow.pop %v92
    %v94 = vadd.f32 %v93, 1.0
    %v95 = vrcp.pop %v94
    %v96 = vmul.f32 1.0, %v95
    %v97 = vlaneseq
    %vm98 = vcmp.ge.s32.totalorder %v97, 0
    %vm99 = vcmp.lt.s32.totalorder %v97, 128
    %vm100 = vmand %vm98, %vm99
    %101 = vst.msk [vmem:[%s3] sm:$0x1] %vm100, %v96
    %s102 = scalar_lea.vmem [#allocation2], 8
    %v103 = vld [vmem:[%s102] sm:$0xff]
    %v104 = vld [vmem:[%s102 + $0x48] sm:$0xff]
    %v105 = vld [vmem:[%s102 + $0x90] sm:$0xff]
    %v106 = vld [vmem:[%s102 + $0xd8] sm:$0xff]
    %v107 = vld [vmem:[%s102 + $0x120] sm:$0xff]
    %v108 = vld [vmem:[%s102 + $0x168] sm:$0xf]
    %s109 = scalar_lea.vmem %s2, 1
    %v110 = vld [vmem:[%s109] sm:$0x1]
    %v111 = vmul.f32 %v44, %v103
    %v112 = vmul.f32 %v49, %v104
    %v113 = vmul.f32 %v54, %v105
    %v114 = vmul.f32 %v59, %v106
    %v115 = vmul.f32 %v64, %v107
    %v116 = vmul.f32 %v69, %v108
    %v117 = vadd.f32 %v111, %v112
    %v118 = vadd.f32 %v117, %v113
    %v119 = vadd.f32 %v118, %v114
    %v120 = vadd.f32 %v119, %v115
    %v121 = vsel %vm81, %v116, 0.0
    %v122 = vadd.f32 %v120, %v121
    %v123 = vrot.slane %v122, 4
    %v124 = vadd.f32 %v122, %v123
    %v125 = vrot.slane %v124, 2
    %v126 = vadd.f32 %v124, %v125
    %v127 = vrot.slane %v126, 1
    %v128 = vadd.f32 %v126, %v127
    %v129 = vadd.f32 %v128, %v110
    %v130 = vsub.f32 0.0, %v129
    %v131 = vmul.f32 %v130, 1.442695
    %v132 = vpow.pop %v131
    %v133 = vadd.f32 %v132, 1.0
    %v134 = vrcp.pop %v133
    %v135 = vmul.f32 1.0, %v134
    %s136 = scalar_lea.vmem %s3, 1
    %137 = vst.msk [vmem:[%s136] sm:$0x1] %vm100, %v135
    %s138 = scalar_lea.vmem [#allocation2], 16
    %v139 = vld [vmem:[%s138] sm:$0xff]
    %v140 = vld [vmem:[%s138 + $0x48] sm:$0xff]
    %v141 = vld [vmem:[%s138 + $0x90] sm:$0xff]
    %v142 = vld [vmem:[%s138 + $0xd8] sm:$0xff]
    %v143 = vld [vmem:[%s138 + $0x120] sm:$0xff]
    %v144 = vld [vmem:[%s138 + $0x168] sm:$0xf]
    %s145 = scalar_lea.vmem %s2, 2
    %v146 = vld [vmem:[%s145] sm:$0x1]
    %v147 = vmul.f32 %v44, %v139
    %v148 = vmul.f32 %v49, %v140
    %v149 = vmul.f32 %v54, %v141
    %v150 = vmul.f32 %v59, %v142
    %v151 = vmul.f32 %v64, %v143
    %v152 = vmul.f32 %v69, %v144
    %v153 = vadd.f32 %v147, %v148
    %v154 = vadd.f32 %v153, %v149
    %v155 = vadd.f32 %v154, %v150
    %v156 = vadd.f32 %v155, %v151
    %v157 = vsel %vm81, %v152, 0.0
    %v158 = vadd.f32 %v156, %v157
    %v159 = vrot.slane %v158, 4
    %v160 = vadd.f32 %v158, %v159
    %v161 = vrot.slane %v160, 2
    %v162 = vadd.f32 %v160, %v161
    %v163 = vrot.slane %v162, 1
    %v164 = vadd.f32 %v162, %v163
    %v165 = vadd.f32 %v164, %v146
    %v166 = vsub.f32 0.0, %v165
    %v167 = vmul.f32 %v166, 1.442695
    %v168 = vpow.pop %v167
    %v169 = vadd.f32 %v168, 1.0
    %v170 = vrcp.pop %v169
    %v171 = vmul.f32 1.0, %v170
    %s172 = scalar_lea.vmem %s3, 2
    %173 = vst.msk [vmem:[%s172] sm:$0x1] %vm100, %v171
    %s174 = scalar_lea.vmem [#allocation2], 24
    %v175 = vld [vmem:[%s174] sm:$0xff]
    %v176 = vld [vmem:[%s174 + $0x48] sm:$0xff]
    %v177 = vld [vmem:[%s174 + $0x90] sm:$0xff]
    %v178 = vld [vmem:[%s174 + $0xd8] sm:$0xff]
    %v179 = vld [vmem:[%s174 + $0x120] sm:$0xff]
    %v180 = vld [vmem:[%s174 + $0x168] sm:$0xf]
    %s181 = scalar_lea.vmem %s2, 3
    %v182 = vld [vmem:[%s181] sm:$0x1]
    %v183 = vmul.f32 %v44, %v175
    %v184 = vmul.f32 %v49, %v176
    %v185 = vmul.f32 %v54, %v177
    %v186 = vmul.f32 %v59, %v178
    %v187 = vmul.f32 %v64, %v179
    %v188 = vmul.f32 %v69, %v180
    %v189 = vadd.f32 %v183, %v184
    %v190 = vadd.f32 %v189, %v185
    %v191 = vadd.f32 %v190, %v186
    %v192 = vadd.f32 %v191, %v187
    %v193 = vsel %vm81, %v188, 0.0
    %v194 = vadd.f32 %v192, %v193
    %v195 = vrot.slane %v194, 4
    %v196 = vadd.f32 %v194, %v195
    %v197 = vrot.slane %v196, 2
    %v198 = vadd.f32 %v196, %v197
    %v199 = vrot.slane %v198, 1
    %v200 = vadd.f32 %v198, %v199
    %v201 = vadd.f32 %v200, %v182
    %v202 = vsub.f32 0.0, %v201
    %v203 = vmul.f32 %v202, 1.442695
    %v204 = vpow.pop %v203
    %v205 = vadd.f32 %v204, 1.0
    %v206 = vrcp.pop %v205
    %v207 = vmul.f32 1.0, %v206
    %s208 = scalar_lea.vmem %s3, 3
    %209 = vst.msk [vmem:[%s208] sm:$0x1] %vm100, %v207
    %s210 = scalar_lea.vmem [#allocation2], 32
    %v211 = vld [vmem:[%s210] sm:$0xff]
    %v212 = vld [vmem:[%s210 + $0x48] sm:$0xff]
    %v213 = vld [vmem:[%s210 + $0x90] sm:$0xff]
    %v214 = vld [vmem:[%s210 + $0xd8] sm:$0xff]
    %v215 = vld [vmem:[%s210 + $0x120] sm:$0xff]
    %v216 = vld [vmem:[%s210 + $0x168] sm:$0xf]
    %s217 = scalar_lea.vmem %s2, 4
    %v218 = vld [vmem:[%s217] sm:$0x1]
    %v219 = vmul.f32 %v44, %v211
    %v220 = vmul.f32 %v49, %v212
    %v221 = vmul.f32 %v54, %v213
    %v222 = vmul.f32 %v59, %v214
    %v223 = vmul.f32 %v64, %v215
    %v224 = vmul.f32 %v69, %v216
    %v225 = vadd.f32 %v219, %v220
    %v226 = vadd.f32 %v225, %v221
    %v227 = vadd.f32 %v226, %v222
    %v228 = vadd.f32 %v227, %v223
    %v229 = vsel %vm81, %v224, 0.0
    %v230 = vadd.f32 %v228, %v229
    %v231 = vrot.slane %v230, 4
    %v232 = vadd.f32 %v230, %v231
    %v233 = vrot.slane %v232, 2
    %v234 = vadd.f32 %v232, %v233
    %v235 = vrot.slane %v234, 1
    %v236 = vadd.f32 %v234, %v235
    %v237 = vadd.f32 %v236, %v218
    %v238 = vsub.f32 0.0, %v237
    %v239 = vmul.f32 %v238, 1.442695
    %v240 = vpow.pop %v239
    %v241 = vadd.f32 %v240, 1.0
    %v242 = vrcp.pop %v241
    %v243 = vmul.f32 1.0, %v242
    %s244 = scalar_lea.vmem %s3, 4
    %245 = vst.msk [vmem:[%s244] sm:$0x1] %vm100, %v243
    %s246 = scalar_lea.vmem [#allocation2], 40
    %v247 = vld [vmem:[%s246] sm:$0xff]
    %v248 = vld [vmem:[%s246 + $0x48] sm:$0xff]
    %v249 = vld [vmem:[%s246 + $0x90] sm:$0xff]
    %v250 = vld [vmem:[%s246 + $0xd8] sm:$0xff]
    %v251 = vld [vmem:[%s246 + $0x120] sm:$0xff]
    %v252 = vld [vmem:[%s246 + $0x168] sm:$0xf]
    %s253 = scalar_lea.vmem %s2, 5
    %v254 = vld [vmem:[%s253] sm:$0x1]
    %v255 = vmul.f32 %v44, %v247
    %v256 = vmul.f32 %v49, %v248
    %v257 = vmul.f32 %v54, %v249
    %v258 = vmul.f32 %v59, %v250
    %v259 = vmul.f32 %v64, %v251
    %v260 = vmul.f32 %v69, %v252
    %v261 = vadd.f32 %v255, %v256
    %v262 = vadd.f32 %v261, %v257
    %v263 = vadd.f32 %v262, %v258
    %v264 = vadd.f32 %v263, %v259
    %v265 = vsel %vm81, %v260, 0.0
    %v266 = vadd.f32 %v264, %v265
    %v267 = vrot.slane %v266, 4
    %v268 = vadd.f32 %v266, %v267
    %v269 = vrot.slane %v268, 2
    %v270 = vadd.f32 %v268, %v269
    %v271 = vrot.slane %v270, 1
    %v272 = vadd.f32 %v270, %v271
    %v273 = vadd.f32 %v272, %v254
    %v274 = vsub.f32 0.0, %v273
    %v275 = vmul.f32 %v274, 1.442695
    %v276 = vpow.pop %v275
    %v277 = vadd.f32 %v276, 1.0
    %v278 = vrcp.pop %v277
    %v279 = vmul.f32 1.0, %v278
    %s280 = scalar_lea.vmem %s3, 5
    %281 = vst.msk [vmem:[%s280] sm:$0x1] %vm100, %v279
    %s282 = scalar_lea.vmem [#allocation2], 48
    %v283 = vld [vmem:[%s282] sm:$0xff]
    %v284 = vld [vmem:[%s282 + $0x48] sm:$0xff]
    %v285 = vld [vmem:[%s282 + $0x90] sm:$0xff]
    %v286 = vld [vmem:[%s282 + $0xd8] sm:$0xff]
    %v287 = vld [vmem:[%s282 + $0x120] sm:$0xff]
    %v288 = vld [vmem:[%s282 + $0x168] sm:$0xf]
    %s289 = scalar_lea.vmem %s2, 6
    %v290 = vld [vmem:[%s289] sm:$0x1]
    %v291 = vmul.f32 %v44, %v283
    %v292 = vmul.f32 %v49, %v284
    %v293 = vmul.f32 %v54, %v285
    %v294 = vmul.f32 %v59, %v286
    %v295 = vmul.f32 %v64, %v287
    %v296 = vmul.f32 %v69, %v288
    %v297 = vadd.f32 %v291, %v292
    %v298 = vadd.f32 %v297, %v293
    %v299 = vadd.f32 %v298, %v294
    %v300 = vadd.f32 %v299, %v295
    %v301 = vsel %vm81, %v296, 0.0
    %v302 = vadd.f32 %v300, %v301
    %v303 = vrot.slane %v302, 4
    %v304 = vadd.f32 %v302, %v303
    %v305 = vrot.slane %v304, 2
    %v306 = vadd.f32 %v304, %v305
    %v307 = vrot.slane %v306, 1
    %v308 = vadd.f32 %v306, %v307
    %v309 = vadd.f32 %v308, %v290
    %v310 = vsub.f32 0.0, %v309
    %v311 = vmul.f32 %v310, 1.442695
    %v312 = vpow.pop %v311
    %v313 = vadd.f32 %v312, 1.0
    %v314 = vrcp.pop %v313
    %v315 = vmul.f32 1.0, %v314
    %s316 = scalar_lea.vmem %s3, 6
    %317 = vst.msk [vmem:[%s316] sm:$0x1] %vm100, %v315
    %s318 = scalar_lea.vmem [#allocation2], 56
    %v319 = vld [vmem:[%s318] sm:$0xff]
    %v320 = vld [vmem:[%s318 + $0x48] sm:$0xff]
    %v321 = vld [vmem:[%s318 + $0x90] sm:$0xff]
    %v322 = vld [vmem:[%s318 + $0xd8] sm:$0xff]
    %v323 = vld [vmem:[%s318 + $0x120] sm:$0xff]
    %v324 = vld [vmem:[%s318 + $0x168] sm:$0xf]
    %s325 = scalar_lea.vmem %s2, 7
    %v326 = vld [vmem:[%s325] sm:$0x1]
    %v327 = vmul.f32 %v44, %v319
    %v328 = vmul.f32 %v49, %v320
    %v329 = vmul.f32 %v54, %v321
    %v330 = vmul.f32 %v59, %v322
    %v331 = vmul.f32 %v64, %v323
    %v332 = vmul.f32 %v69, %v324
    %v333 = vadd.f32 %v327, %v328
    %v334 = vadd.f32 %v333, %v329
    %v335 = vadd.f32 %v334, %v330
    %v336 = vadd.f32 %v335, %v331
    %v337 = vsel %vm81, %v332, 0.0
    %v338 = vadd.f32 %v336, %v337
    %v339 = vrot.slane %v338, 4
    %v340 = vadd.f32 %v338, %v339
    %v341 = vrot.slane %v340, 2
    %v342 = vadd.f32 %v340, %v341
    %v343 = vrot.slane %v342, 1
    %v344 = vadd.f32 %v342, %v343
    %v345 = vadd.f32 %v344, %v326
    %v346 = vsub.f32 0.0, %v345
    %v347 = vmul.f32 %v346, 1.442695
    %v348 = vpow.pop %v347
    %v349 = vadd.f32 %v348, 1.0
    %v350 = vrcp.pop %v349
    %v351 = vmul.f32 1.0, %v350
    %s352 = scalar_lea.vmem %s3, 7
    %353 = vst.msk [vmem:[%s352] sm:$0x1] %vm100, %v351
    %s354 = scalar_lea.vmem [#allocation2], 64
    %v355 = vld [vmem:[%s354] sm:$0xff]
    %v356 = vld [vmem:[%s354 + $0x48] sm:$0xff]
    %v357 = vld [vmem:[%s354 + $0x90] sm:$0xff]
    %v358 = vld [vmem:[%s354 + $0xd8] sm:$0xff]
    %v359 = vld [vmem:[%s354 + $0x120] sm:$0xff]
    %v360 = vld [vmem:[%s354 + $0x168] sm:$0xf]
    %s361 = scalar_lea.vmem %s2, 8
    %v362 = vld [vmem:[%s361] sm:$0x1]
    %v363 = vmul.f32 %v44, %v355
    %v364 = vmul.f32 %v49, %v356
    %v365 = vmul.f32 %v54, %v357
    %v366 = vmul.f32 %v59, %v358
    %v367 = vmul.f32 %v64, %v359
    %v368 = vmul.f32 %v69, %v360
    %v369 = vadd.f32 %v363, %v364
    %v370 = vadd.f32 %v369, %v365
    %v371 = vadd.f32 %v370, %v366
    %v372 = vadd.f32 %v371, %v367
    %v373 = vsel %vm81, %v368, 0.0
    %v374 = vadd.f32 %v372, %v373
    %v375 = vrot.slane %v374, 4
    %v376 = vadd.f32 %v374, %v375
    %v377 = vrot.slane %v376, 2
    %v378 = vadd.f32 %v376, %v377
    %v379 = vrot.slane %v378, 1
    %v380 = vadd.f32 %v378, %v379
    %v381 = vadd.f32 %v380, %v362
    %v382 = vsub.f32 0.0, %v381
    %v383 = vmul.f32 %v382, 1.442695
    %v384 = vpow.pop %v383
    %v385 = vadd.f32 %v384, 1.0
    %v386 = vrcp.pop %v385
    %v387 = vmul.f32 1.0, %v386
    %s388 = scalar_lea.vmem %s3, 8
    %389 = vst.msk [vmem:[%s388] sm:$0x1] %vm100, %v387
    // Predicated region
    $region18: #{conv1x1_sigmoid.1} parent=1 // pred_check
      _
    $region19: #{conv1x1_sigmoid.1} parent=1 // pred_check_branch
      %391 = sbr.rel (0) target = $region21
    $region20: #{conv1x1_sigmoid.1} parent=1 // pred_region
      _
    $region21: #{conv1x1_sigmoid.1} parent=1 // pred_fallthru
      _
    // Predicated region
    $region22: #{conv1x1_sigmoid.1} parent=1 // pred_check
      _
    $region23: #{conv1x1_sigmoid.1} parent=1 // pred_check_branch
      %393 = sbr.rel (0) target = $region25
    $region24: #{conv1x1_sigmoid.1} parent=1 // pred_region
      _
    $region25: #{conv1x1_sigmoid.1} parent=1 // pred_fallthru
      _
    %394 = vsyncpa [#allocation3], 1

</llo_original>
